<compile_context>
chip_gen: v7x
topology: tpu7x:2x2x1
jax: 0.10.0
libtpu: 0.0.40
codegen_flags: <defaults>
</compile_context>

<pallas_src>
import jax
import jax.numpy as jnp
from jax.experimental import pallas as pl
from jax.experimental.pallas import tpu as pltpu

_LANE = 128      # vreg lane width
_SUBLANE = 8     # vreg sublane count (f32)


def _round_up(x, m):
    return ((x + m - 1) // m) * m


def _vmem_capacity_bytes():
    try:
        return int(pltpu.get_tpu_info().vmem_capacity_bytes)
    except Exception:
        return 128 * 1024 * 1024   # v5e / v6e physical VMEM


def _tensorcores_per_chip():
    try:
        kind = jax.devices()[0].device_kind.lower()
        if "v7" in kind:
            return 2
    except Exception:
        pass
    return 1


def _make_mlp_kernel(compute_dtype):
    """4-layer MLP forward for one [tile_b, in_features] batch tile in VMEM."""

    def kernel(x_ref,
               w1_ref, b1_ref,
               w2_ref, b2_ref,
               w3_ref, b3_ref,
               w4_ref, b4_ref,
               o_ref):
        def dense(a, w_ref, b_ref):
            # Weights arrive pre-transposed as [fan_in, fan_out]; bias is
            # [1, fan_out] and broadcasts over the batch (sublane) axis.
            return (jnp.dot(a.astype(compute_dtype), w_ref[...],
                            preferred_element_type=jnp.float32)
                    + b_ref[...])

        h = jax.nn.sigmoid(dense(x_ref[...], w1_ref, b1_ref))
        h = jax.nn.sigmoid(dense(h, w2_ref, b2_ref))
        h = jax.nn.sigmoid(dense(h, w3_ref, b3_ref))
        o_ref[...] = dense(h, w4_ref, b4_ref).astype(o_ref.dtype)

    return kernel


def mlp_forward(x, params, *, tile_b=8192, matmul_dtype=None):
    """x: [B, in_features].  params: torch-layout weights, [1, fan_out] biases.

    Returns [B, in_features].  matmul_dtype=jnp.bfloat16 is an optional
    throughput win on v6e/v7x (elementwise work stays in f32).
    """
    B, in_features = x.shape
    compute_dtype = jnp.dtype(matmul_dtype) if matmul_dtype is not None else x.dtype

    # Pre-transpose the (few-KB) weights once to MXU-friendly [fan_in, fan_out].
    w1 = params["w1"].T.astype(compute_dtype)
    w2 = params["w2"].T.astype(compute_dtype)
    w3 = params["w3"].T.astype(compute_dtype)
    w4 = params["w4"].T.astype(compute_dtype)
    b1, b2, b3, b4 = (params[k].astype(jnp.float32) for k in ("b1", "b2", "b3", "b4"))
    n_middle = w1.shape[1]
    n_hidden = w2.shape[1]

    # --- batch tile: big enough to amortize per-step overhead, small enough
    # --- for the per-chip VMEM budget (VMEM lanes pad to 128).
    per_row_bytes = 4 * (2 * 2 * _round_up(in_features, _LANE)    # x/y blocks, double-buffered
                         + 2 * _round_up(n_middle, _LANE)         # h1, h3
                         + _round_up(n_hidden, _LANE))            # h2
    vmem_budget = min(_vmem_capacity_bytes() // 2, 64 * 1024 * 1024)
    tile_cap = max(_SUBLANE,
                   (vmem_budget // (2 * per_row_bytes)) // _SUBLANE * _SUBLANE)
    tile = min(int(tile_b), _round_up(B, _SUBLANE), tile_cap)
    tile = max(_SUBLANE, (tile // _SUBLANE) * _SUBLANE)

    num_tiles = pl.cdiv(B, tile)
    # Only on 2-TensorCore parts (v7x): split a single-tile grid so the
    # "parallel" batch axis can be sharded across both cores.
    if _tensorcores_per_chip() >= 2 and num_tiles < 2 and tile >= 2 * _SUBLANE:
        tile = max(_SUBLANE, ((tile // 2) // _SUBLANE) * _SUBLANE)
        num_tiles = pl.cdiv(B, tile)

    def full_spec(arr):
        # Tiny parameter arrays: whole array every step (block == full dims).
        return pl.BlockSpec(arr.shape, lambda i: (0, 0))

    layer_dims = [(in_features, n_middle), (n_middle, n_hidden),
                  (n_hidden, n_middle), (n_middle, in_features)]
    flops = 2 * B * sum(fi * fo for fi, fo in layer_dims)
    transcendentals = B * (2 * n_middle + n_hidden)                # sigmoids
    param_bytes = sum(int(p.size) * p.dtype.itemsize
                      for p in (w1, b1, w2, b2, w3, b3, w4, b4))
    bytes_accessed = 2 * B * in_features * x.dtype.itemsize + param_bytes

    return pl.pallas_call(
        _make_mlp_kernel(compute_dtype),
        out_shape=jax.ShapeDtypeStruct((B, in_features), x.dtype),
        grid_spec=pltpu.PrefetchScalarGridSpec(
            num_scalar_prefetch=0,
            grid=(num_tiles,),
            in_specs=[
                pl.BlockSpec((tile, in_features), lambda i: (i, 0)),   # x tile
                full_spec(w1), full_spec(b1),
                full_spec(w2), full_spec(b2),
                full_spec(w3), full_spec(b3),
                full_spec(w4), full_spec(b4),
            ],
            out_specs=pl.BlockSpec((tile, in_features), lambda i: (i, 0)),
        ),
        compiler_params=pltpu.CompilerParams(
            dimension_semantics=("parallel",),
            vmem_limit_bytes=int(vmem_budget),
        ),
        cost_estimate=pl.CostEstimate(
            flops=int(flops),
            transcendentals=int(transcendentals),
            bytes_accessed=int(bytes_accessed),
        ),
    )(x, w1, b1, w2, b2, w3, b3, w4, b4)


def init_mlp_params(key, in_features, n_hidden, dtype=jnp.float32):
    """Deterministic init mimicking torch.nn.Linear's U(-1/sqrt(fan_in), ...).

    Weights kept in torch layout [fan_out, fan_in]; biases as [1, fan_out].
    """
    n_middle = int((in_features - n_hidden) / 2) + n_hidden
    dims = [(in_features, n_middle),   # linear1
            (n_middle, n_hidden),      # linear2
            (n_hidden, n_middle),      # linear3
            (n_middle, in_features)]   # linear4
    params = {}
    for idx, (fan_in, fan_out) in enumerate(dims, start=1):
        key, kw, kb = jax.random.split(key, 3)
        bound = 1.0 / (fan_in ** 0.5)
        params[f"w{idx}"] = jax.random.uniform(
            kw, (fan_out, fan_in), dtype, minval=-bound, maxval=bound)
        params[f"b{idx}"] = jax.random.uniform(
            kb, (1, fan_out), dtype, minval=-bound, maxval=bound)
    return params, n_middle


def mlp_forward_ref(x, params):
    """Pure-JAX reference for correctness."""
    h = jax.nn.sigmoid(x @ params["w1"].T + params["b1"])
    h = jax.nn.sigmoid(h @ params["w2"].T + params["b2"])
    h = jax.nn.sigmoid(h @ params["w3"].T + params["b3"])
    return h @ params["w4"].T + params["b4"]


# TODO(synk): run_epoch (training loop / optimizer / loss) is host-side torch
# orchestration, not a kernel — intentionally not translated.

if __name__ == "__main__":
    in_features = 32
    n_hidden = 8

    key = jax.random.PRNGKey(0)
    key, k1, k2 = jax.random.split(key, 3)
    params, n_middle = init_mlp_params(key, in_features, n_hidden)

    # Ragged batch (not a multiple of 8 or 128): exercises the masked
    # last-block path with no explicit padding anywhere.
    x = jax.random.normal(k1, (50, in_features), jnp.float32)
    y = jax.block_until_ready(mlp_forward(x, params))
    y_ref = mlp_forward_ref(x, params)
    assert y.shape == (50, in_features)
    assert jnp.allclose(y, y_ref, atol=1e-3, rtol=1e-3), "mismatch (single tile)"

    # Multi-tile grid path with a small forced tile (ragged last block again).
    x2 = jax.random.normal(k2, (300, in_features), jnp.float32)
    y2 = jax.block_until_ready(mlp_forward(x2, params, tile_b=64))
    y2_ref = mlp_forward_ref(x2, params)
    assert y2.shape == (300, in_features)
    assert jnp.allclose(y2, y2_ref, atol=1e-3, rtol=1e-3), "mismatch (multi tile)"

    print("KERNEL_OK")
</pallas_src>

<mosaic_0001>
module attributes {stable_mosaic.version = 11 : i64} {
  func.func @kernel(%arg0: i32, %arg1: memref<56x32xf32, #tpu.memory_space<vmem>>, %arg2: memref<32x20xf32, #tpu.memory_space<vmem>>, %arg3: memref<1x20xf32, #tpu.memory_space<vmem>>, %arg4: memref<20x8xf32, #tpu.memory_space<vmem>>, %arg5: memref<1x8xf32, #tpu.memory_space<vmem>>, %arg6: memref<8x20xf32, #tpu.memory_space<vmem>>, %arg7: memref<1x20xf32, #tpu.memory_space<vmem>>, %arg8: memref<20x32xf32, #tpu.memory_space<vmem>>, %arg9: memref<1x32xf32, #tpu.memory_space<vmem>>, %arg10: memref<56x32xf32, #tpu.memory_space<vmem>>) attributes {dimension_semantics = [#tpu.dimension_semantics<parallel>], iteration_bounds = array<i64: 1>, scalar_prefetch = 0 : i64, scratch_operands = 0 : i64, tpu.core_type = #tpu.core_type<tc>, window_params = [{transform_indices = @transform_0, window_bounds = array<i64: 56, 32>}, {pipeline_mode = #tpu.pipeline_mode<synchronous>, transform_indices = @transform_1, window_bounds = array<i64: 32, 20>}, {pipeline_mode = #tpu.pipeline_mode<synchronous>, transform_indices = @transform_2, window_bounds = array<i64: 1, 20>}, {pipeline_mode = #tpu.pipeline_mode<synchronous>, transform_indices = @transform_3, window_bounds = array<i64: 20, 8>}, {pipeline_mode = #tpu.pipeline_mode<synchronous>, transform_indices = @transform_4, window_bounds = array<i64: 1, 8>}, {pipeline_mode = #tpu.pipeline_mode<synchronous>, transform_indices = @transform_5, window_bounds = array<i64: 8, 20>}, {pipeline_mode = #tpu.pipeline_mode<synchronous>, transform_indices = @transform_6, window_bounds = array<i64: 1, 20>}, {pipeline_mode = #tpu.pipeline_mode<synchronous>, transform_indices = @transform_7, window_bounds = array<i64: 20, 32>}, {pipeline_mode = #tpu.pipeline_mode<synchronous>, transform_indices = @transform_8, window_bounds = array<i64: 1, 32>}, {transform_indices = @transform_9, window_bounds = array<i64: 56, 32>}]} {
    %c0 = arith.constant 0 : index
    %c0_0 = arith.constant 0 : index
    %0 = vector.load %arg1[%c0, %c0_0] : memref<56x32xf32, #tpu.memory_space<vmem>>, vector<56x32xf32>
    %c0_1 = arith.constant 0 : index
    %c0_2 = arith.constant 0 : index
    %1 = vector.load %arg2[%c0_1, %c0_2] : memref<32x20xf32, #tpu.memory_space<vmem>>, vector<32x20xf32>
    %cst = arith.constant dense<0.000000e+00> : vector<56x20xf32>
    %2 = tpu.matmul %0, %1, %cst {dimension_numbers = #tpu.dot_dimension_numbers<[1], [0], [0], [1], [0, 0, 1, 1], [], []>} : vector<56x32xf32>, vector<32x20xf32>, vector<56x20xf32> -> vector<56x20xf32>
    %c0_3 = arith.constant 0 : index
    %c0_4 = arith.constant 0 : index
    %3 = vector.load %arg3[%c0_3, %c0_4] : memref<1x20xf32, #tpu.memory_space<vmem>>, vector<1x20xf32>
    %4 = vector.broadcast %3 : vector<1x20xf32> to vector<56x20xf32>
    %5 = arith.addf %2, %4 : vector<56x20xf32>
    %6 = arith.negf %5 : vector<56x20xf32>
    %7 = math.exp %6 : vector<56x20xf32>
    %cst_5 = arith.constant 1.000000e+00 : f32
    %8 = vector.broadcast %cst_5 : f32 to vector<56x20xf32>
    %9 = arith.addf %8, %7 : vector<56x20xf32>
    %10 = arith.divf %8, %9 : vector<56x20xf32>
    %c0_6 = arith.constant 0 : index
    %c0_7 = arith.constant 0 : index
    %11 = vector.load %arg4[%c0_6, %c0_7] : memref<20x8xf32, #tpu.memory_space<vmem>>, vector<20x8xf32>
    %cst_8 = arith.constant dense<0.000000e+00> : vector<56x8xf32>
    %12 = tpu.matmul %10, %11, %cst_8 {dimension_numbers = #tpu.dot_dimension_numbers<[1], [0], [0], [1], [0, 0, 1, 1], [], []>} : vector<56x20xf32>, vector<20x8xf32>, vector<56x8xf32> -> vector<56x8xf32>
    %c0_9 = arith.constant 0 : index
    %c0_10 = arith.constant 0 : index
    %13 = vector.load %arg5[%c0_9, %c0_10] : memref<1x8xf32, #tpu.memory_space<vmem>>, vector<1x8xf32>
    %14 = vector.broadcast %13 : vector<1x8xf32> to vector<56x8xf32>
    %15 = arith.addf %12, %14 : vector<56x8xf32>
    %16 = arith.negf %15 : vector<56x8xf32>
    %17 = math.exp %16 : vector<56x8xf32>
    %cst_11 = arith.constant 1.000000e+00 : f32
    %18 = vector.broadcast %cst_11 : f32 to vector<56x8xf32>
    %19 = arith.addf %18, %17 : vector<56x8xf32>
    %20 = arith.divf %18, %19 : vector<56x8xf32>
    %c0_12 = arith.constant 0 : index
    %c0_13 = arith.constant 0 : index
    %21 = vector.load %arg6[%c0_12, %c0_13] : memref<8x20xf32, #tpu.memory_space<vmem>>, vector<8x20xf32>
    %cst_14 = arith.constant dense<0.000000e+00> : vector<56x20xf32>
    %22 = tpu.matmul %20, %21, %cst_14 {dimension_numbers = #tpu.dot_dimension_numbers<[1], [0], [0], [1], [0, 0, 1, 1], [], []>} : vector<56x8xf32>, vector<8x20xf32>, vector<56x20xf32> -> vector<56x20xf32>
    %c0_15 = arith.constant 0 : index
    %c0_16 = arith.constant 0 : index
    %23 = vector.load %arg7[%c0_15, %c0_16] : memref<1x20xf32, #tpu.memory_space<vmem>>, vector<1x20xf32>
    %24 = vector.broadcast %23 : vector<1x20xf32> to vector<56x20xf32>
    %25 = arith.addf %22, %24 : vector<56x20xf32>
    %26 = arith.negf %25 : vector<56x20xf32>
    %27 = math.exp %26 : vector<56x20xf32>
    %cst_17 = arith.constant 1.000000e+00 : f32
    %28 = vector.broadcast %cst_17 : f32 to vector<56x20xf32>
    %29 = arith.addf %28, %27 : vector<56x20xf32>
    %30 = arith.divf %28, %29 : vector<56x20xf32>
    %c0_18 = arith.constant 0 : index
    %c0_19 = arith.constant 0 : index
    %31 = vector.load %arg8[%c0_18, %c0_19] : memref<20x32xf32, #tpu.memory_space<vmem>>, vector<20x32xf32>
    %cst_20 = arith.constant dense<0.000000e+00> : vector<56x32xf32>
    %32 = tpu.matmul %30, %31, %cst_20 {dimension_numbers = #tpu.dot_dimension_numbers<[1], [0], [0], [1], [0, 0, 1, 1], [], []>} : vector<56x20xf32>, vector<20x32xf32>, vector<56x32xf32> -> vector<56x32xf32>
    %c0_21 = arith.constant 0 : index
    %c0_22 = arith.constant 0 : index
    %33 = vector.load %arg9[%c0_21, %c0_22] : memref<1x32xf32, #tpu.memory_space<vmem>>, vector<1x32xf32>
    %34 = vector.broadcast %33 : vector<1x32xf32> to vector<56x32xf32>
    %35 = arith.addf %32, %34 : vector<56x32xf32>
    %c0_23 = arith.constant 0 : index
    %c0_24 = arith.constant 0 : index
    %36 = vector.load %arg10[%c0_23, %c0_24] : memref<56x32xf32, #tpu.memory_space<vmem>>, vector<56x32xf32>
    tpu.vector_store %arg10[%c0_23, %c0_24], %35 {strides = array<i32>} : memref<56x32xf32, #tpu.memory_space<vmem>>, vector<56x32xf32>,
    return
  }
  func.func @transform_0(%arg0: i32) -> (i32, i32) {
    %c0_i32 = arith.constant 0 : i32
    %c0_i32_0 = arith.constant 0 : i32
    return %arg0, %c0_i32 : i32, i32
  }
  func.func @transform_1(%arg0: i32) -> (i32, i32) {
    %c0_i32 = arith.constant 0 : i32
    %c0_i32_0 = arith.constant 0 : i32
    %c0_i32_1 = arith.constant 0 : i32
    return %c0_i32, %c0_i32_0 : i32, i32
  }
  func.func @transform_2(%arg0: i32) -> (i32, i32) {
    %c0_i32 = arith.constant 0 : i32
    %c0_i32_0 = arith.constant 0 : i32
    %c0_i32_1 = arith.constant 0 : i32
    return %c0_i32, %c0_i32_0 : i32, i32
  }
  func.func @transform_3(%arg0: i32) -> (i32, i32) {
    %c0_i32 = arith.constant 0 : i32
    %c0_i32_0 = arith.constant 0 : i32
    %c0_i32_1 = arith.constant 0 : i32
    return %c0_i32, %c0_i32_0 : i32, i32
  }
  func.func @transform_4(%arg0: i32) -> (i32, i32) {
    %c0_i32 = arith.constant 0 : i32
    %c0_i32_0 = arith.constant 0 : i32
    %c0_i32_1 = arith.constant 0 : i32
    return %c0_i32, %c0_i32_0 : i32, i32
  }
  func.func @transform_5(%arg0: i32) -> (i32, i32) {
    %c0_i32 = arith.constant 0 : i32
    %c0_i32_0 = arith.constant 0 : i32
    %c0_i32_1 = arith.constant 0 : i32
    return %c0_i32, %c0_i32_0 : i32, i32
  }
  func.func @transform_6(%arg0: i32) -> (i32, i32) {
    %c0_i32 = arith.constant 0 : i32
    %c0_i32_0 = arith.constant 0 : i32
    %c0_i32_1 = arith.constant 0 : i32
    return %c0_i32, %c0_i32_0 : i32, i32
  }
  func.func @transform_7(%arg0: i32) -> (i32, i32) {
    %c0_i32 = arith.constant 0 : i32
    %c0_i32_0 = arith.constant 0 : i32
    %c0_i32_1 = arith.constant 0 : i32
    return %c0_i32, %c0_i32_0 : i32, i32
  }
  func.func @transform_8(%arg0: i32) -> (i32, i32) {
    %c0_i32 = arith.constant 0 : i32
    %c0_i32_0 = arith.constant 0 : i32
    %c0_i32_1 = arith.constant 0 : i32
    return %c0_i32, %c0_i32_0 : i32, i32
  }
  func.func @transform_9(%arg0: i32) -> (i32, i32) {
    %c0_i32 = arith.constant 0 : i32
    %c0_i32_0 = arith.constant 0 : i32
    return %arg0, %c0_i32 : i32, i32
  }
}

</mosaic_0001>

<llo_original>
// kernel: tpu_custom_call.1
$region0: #{tpu_custom_call.1}
  #allocation0 [shape = 'u32[]', space=smem, size = 0x4, offset = 0x4, fixed_abs, tag = 'smem constant byte address 0x4 - core index']
  #allocation1 [shape = 'u32[144,128]{1,0:T(1,128)}', space=vmem, size = 0x12000, scoped, tag = 'internal scratch']
  %s0 = inlined_call_operand.hbm [shape: f32[50,32], index: 0, kind: input, shape index: {}]
  %s1 = inlined_call_operand.hbm [shape: f32[32,20], index: 1, kind: input, shape index: {}]
  %s2 = inlined_call_operand.hbm [shape: f32[1,20], index: 2, kind: input, shape index: {}]
  %s3 = inlined_call_operand.hbm [shape: f32[20,8], index: 3, kind: input, shape index: {}]
  %s4 = inlined_call_operand.hbm [shape: f32[1,8], index: 4, kind: input, shape index: {}]
  %s5 = inlined_call_operand.hbm [shape: f32[8,20], index: 5, kind: input, shape index: {}]
  %s6 = inlined_call_operand.hbm [shape: f32[1,20], index: 6, kind: input, shape index: {}]
  %s7 = inlined_call_operand.hbm [shape: f32[20,32], index: 7, kind: input, shape index: {}]
  %s8 = inlined_call_operand.hbm [shape: f32[1,32], index: 8, kind: input, shape index: {}]
  %s9 = inlined_call_operand.hbm [shape: f32[50,32], index: 9, kind: output, shape index: {}]
  %s10 = sld [smem:[#allocation0]]
  $region82: #{tpu_custom_call.1} parent=0
    _
  %s12 = ssub.s32 1, %s10
  %s13 = scalar_select 0, %s12, %s10
  $region1: #{tpu_custom_call.1} parent=0
    #allocation2 [shape = 'u8[28672]{0}', space=vmem, size = 0x7000, scoped, tag = 'input window, operand 0, single buffered']
    #allocation3 [shape = 's32[1]{0}', space=sflag, size = 0x4, scoped, tag = 'scoped memory for tpu_custom_call.1']
    #allocation4 [shape = 's32[1]{0}', space=sflag, size = 0x4, scoped, tag = 'scoped memory for tpu_custom_call.1']
    #allocation5 [shape = 'u8[16384]{0}', space=vmem, size = 0x4000, scoped, tag = 'input window, operand 1, single buffered']
    #allocation6 [shape = 's32[1]{0}', space=sflag, size = 0x4, scoped, tag = 'scoped memory for tpu_custom_call.1']
    #allocation7 [shape = 'u8[512]{0}', space=vmem, size = 0x400, scoped, tag = 'input window, operand 2, single buffered']
    #allocation8 [shape = 'u8[12288]{0}', space=vmem, size = 0x3000, scoped, tag = 'input window, operand 3, single buffered']
    #allocation9 [shape = 's32[1]{0}', space=sflag, size = 0x4, scoped, tag = 'scoped memory for tpu_custom_call.1']
    #allocation10 [shape = 'u8[512]{0}', space=vmem, size = 0x400, scoped, tag = 'input window, operand 4, single buffered']
    #allocation11 [shape = 'u8[4096]{0}', space=vmem, size = 0x1000, scoped, tag = 'input window, operand 5, single buffered']
    #allocation12 [shape = 's32[1]{0}', space=sflag, size = 0x4, scoped, tag = 'scoped memory for tpu_custom_call.1']
    #allocation13 [shape = 'u8[512]{0}', space=vmem, size = 0x400, scoped, tag = 'input window, operand 6, single buffered']
    #allocation14 [shape = 'u8[12288]{0}', space=vmem, size = 0x3000, scoped, tag = 'input window, operand 7, single buffered']
    #allocation15 [shape = 's32[1]{0}', space=sflag, size = 0x4, scoped, tag = 'scoped memory for tpu_custom_call.1']
    #allocation16 [shape = 'u8[512]{0}', space=vmem, size = 0x400, scoped, tag = 'input window, operand 8, single buffered']
    #allocation17 [shape = 'u8[28672]{0}', space=vmem, size = 0x7000, scoped, tag = 'output window, operand 0, single buffered']
    %14 = vsyncpa [#allocation3], 0
    %15 = vsyncpa [#allocation6], 0
    %16 = vsyncpa [#allocation9], 0
    %17 = vsyncpa [#allocation12], 0
    %18 = vsyncpa [#allocation15], 0
    %19 = vsyncpa [#allocation4], 0
    // Predicated region
    $region2: #{tpu_custom_call.1} parent=1 // pred_check
      _
    $region3: #{tpu_custom_call.1} parent=1 // pred_check_branch
      %21 = sbr.rel (0) target = $region5
    $region4: #{tpu_custom_call.1} parent=1 // pred_region
      %s23 = ssub.s32 896, 896
      %24 = vsyncadd [#allocation3], %s23
      %s25 = sshll.u32 [#allocation2], 4
      %s26 = int_to_ptr.vmem [resolvable:$true] %s25
      %31 = dma.hbm_to_vmem [thread:$0]  %s0, 896, %s26, [#allocation3], 128, 128, 8
    $region5: #{tpu_custom_call.1} parent=1 // pred_fallthru
      _
    // Predicated region
    $region6: #{tpu_custom_call.1} parent=1 // pred_check
      _
    $region7: #{tpu_custom_call.1} parent=1 // pred_check_branch
      %33 = sbr.rel (0) target = $region9
    $region8: #{tpu_custom_call.1} parent=1 // pred_region
      %s35 = ssub.s32 512, 512
      %36 = vsyncadd [#allocation6], %s35
      %s37 = sshll.u32 [#allocation5], 4
      %s38 = int_to_ptr.vmem [resolvable:$true] %s37
      %43 = dma.hbm_to_vmem [thread:$0]  %s1, 512, %s38, [#allocation6], 128, 128, 8
    $region9: #{tpu_custom_call.1} parent=1 // pred_fallthru
      _
    // Predicated region
    $region10: #{tpu_custom_call.1} parent=1 // pred_check
      _
    $region11: #{tpu_custom_call.1} parent=1 // pred_check_branch
      %45 = sbr.rel (0) target = $region13
    $region12: #{tpu_custom_call.1} parent=1 // pred_region
      %s47 = ssub.s32 16, 16
      %48 = vsyncadd [#allocation6], %s47
      %s50 = sshll.u32 [#allocation7], 4
      %s51 = int_to_ptr.vmem [resolvable:$true] %s50
      %53 = dma.hbm_to_vmem [thread:$0]  %s2, 16, %s51, [#allocation6]
    $region13: #{tpu_custom_call.1} parent=1 // pred_fallthru
      _
    // Predicated region
    $region14: #{tpu_custom_call.1} parent=1 // pred_check
      _
    $region15: #{tpu_custom_call.1} parent=1 // pred_check_branch
      %55 = sbr.rel (0) target = $region17
    $region16: #{tpu_custom_call.1} parent=1 // pred_region
      %s57 = ssub.s32 384, 384
      %58 = vsyncadd [#allocation9], %s57
      %s59 = sshll.u32 [#allocation8], 4
      %s60 = int_to_ptr.vmem [resolvable:$true] %s59
      %65 = dma.hbm_to_vmem [thread:$0]  %s3, 384, %s60, [#allocation9], 128, 128, 8
    $region17: #{tpu_custom_call.1} parent=1 // pred_fallthru
      _
    // Predicated region
    $region18: #{tpu_custom_call.1} parent=1 // pred_check
      _
    $region19: #{tpu_custom_call.1} parent=1 // pred_check_branch
      %67 = sbr.rel (0) target = $region21
    $region20: #{tpu_custom_call.1} parent=1 // pred_region
      %s69 = ssub.s32 16, 16
      %70 = vsyncadd [#allocation9], %s69
      %s72 = sshll.u32 [#allocation10], 4
      %s73 = int_to_ptr.vmem [resolvable:$true] %s72
      %75 = dma.hbm_to_vmem [thread:$0]  %s4, 16, %s73, [#allocation9]
    $region21: #{tpu_custom_call.1} parent=1 // pred_fallthru
      _
    // Predicated region
    $region22: #{tpu_custom_call.1} parent=1 // pred_check
      _
    $region23: #{tpu_custom_call.1} parent=1 // pred_check_branch
      %77 = sbr.rel (0) target = $region25
    $region24: #{tpu_custom_call.1} parent=1 // pred_region
      %s79 = ssub.s32 128, 128
      %80 = vsyncadd [#allocation12], %s79
      %s82 = sshll.u32 [#allocation11], 4
      %s83 = int_to_ptr.vmem [resolvable:$true] %s82
      %85 = dma.hbm_to_vmem [thread:$0]  %s5, 128, %s83, [#allocation12]
    $region25: #{tpu_custom_call.1} parent=1 // pred_fallthru
      _
    // Predicated region
    $region26: #{tpu_custom_call.1} parent=1 // pred_check
      _
    $region27: #{tpu_custom_call.1} parent=1 // pred_check_branch
      %87 = sbr.rel (0) target = $region29
    $region28: #{tpu_custom_call.1} parent=1 // pred_region
      %s89 = ssub.s32 16, 16
      %90 = vsyncadd [#allocation12], %s89
      %s92 = sshll.u32 [#allocation13], 4
      %s93 = int_to_ptr.vmem [resolvable:$true] %s92
      %95 = dma.hbm_to_vmem [thread:$0]  %s6, 16, %s93, [#allocation12]
    $region29: #{tpu_custom_call.1} parent=1 // pred_fallthru
      _
    // Predicated region
    $region30: #{tpu_custom_call.1} parent=1 // pred_check
      _
    $region31: #{tpu_custom_call.1} parent=1 // pred_check_branch
      %97 = sbr.rel (0) target = $region33
    $region32: #{tpu_custom_call.1} parent=1 // pred_region
      %s99 = ssub.s32 384, 384
      %100 = vsyncadd [#allocation15], %s99
      %s101 = sshll.u32 [#allocation14], 4
      %s102 = int_to_ptr.vmem [resolvable:$true] %s101
      %107 = dma.hbm_to_vmem [thread:$0]  %s7, 384, %s102, [#allocation15], 128, 128, 8
    $region33: #{tpu_custom_call.1} parent=1 // pred_fallthru
      _
    // Predicated region
    $region34: #{tpu_custom_call.1} parent=1 // pred_check
      _
    $region35: #{tpu_custom_call.1} parent=1 // pred_check_branch
      %109 = sbr.rel (0) target = $region37
    $region36: #{tpu_custom_call.1} parent=1 // pred_region
      %s111 = ssub.s32 16, 16
      %112 = vsyncadd [#allocation15], %s111
      %s114 = sshll.u32 [#allocation16], 4
      %s115 = int_to_ptr.vmem [resolvable:$true] %s114
      %117 = dma.hbm_to_vmem [thread:$0]  %s8, 16, %s115, [#allocation15]
    $region37: #{tpu_custom_call.1} parent=1 // pred_fallthru
      _
    // Predicated region
    $region38: #{tpu_custom_call.1} parent=1 // pred_check
      _
    $region39: #{tpu_custom_call.1} parent=1 // pred_check_branch
      %119 = sbr.rel (0) target = $region41
    $region40: #{tpu_custom_call.1} parent=1 // pred_region
      %120 = dma.done [#allocation3], 896
    $region41: #{tpu_custom_call.1} parent=1 // pred_fallthru
      _
    // Predicated region
    $region42: #{tpu_custom_call.1} parent=1 // pred_check
      _
    $region43: #{tpu_custom_call.1} parent=1 // pred_check_branch
      %122 = sbr.rel (0) target = $region45
    $region44: #{tpu_custom_call.1} parent=1 // pred_region
      %123 = dma.done [#allocation6], 512
    $region45: #{tpu_custom_call.1} parent=1 // pred_fallthru
      _
    // Predicated region
    $region46: #{tpu_custom_call.1} parent=1 // pred_check
      _
    $region47: #{tpu_custom_call.1} parent=1 // pred_check_branch
      %125 = sbr.rel (0) target = $region49
    $region48: #{tpu_custom_call.1} parent=1 // pred_region
      %126 = dma.done [#allocation6], 16
    $region49: #{tpu_custom_call.1} parent=1 // pred_fallthru
      _
    // Predicated region
    $region50: #{tpu_custom_call.1} parent=1 // pred_check
      _
    $region51: #{tpu_custom_call.1} parent=1 // pred_check_branch
      %128 = sbr.rel (0) target = $region53
    $region52: #{tpu_custom_call.1} parent=1 // pred_region
      %129 = dma.done [#allocation9], 384
    $region53: #{tpu_custom_call.1} parent=1 // pred_fallthru
      _
    // Predicated region
    $region54: #{tpu_custom_call.1} parent=1 // pred_check
      _
    $region55: #{tpu_custom_call.1} parent=1 // pred_check_branch
      %131 = sbr.rel (0) target = $region57
    $region56: #{tpu_custom_call.1} parent=1 // pred_region
      %132 = dma.done [#allocation9], 16
    $region57: #{tpu_custom_call.1} parent=1 // pred_fallthru
      _
    // Predicated region
    $region58: #{tpu_custom_call.1} parent=1 // pred_check
      _
    $region59: #{tpu_custom_call.1} parent=1 // pred_check_branch
      %134 = sbr.rel (0) target = $region61
    $region60: #{tpu_custom_call.1} parent=1 // pred_region
      %135 = dma.done [#allocation12], 128
    $region61: #{tpu_custom_call.1} parent=1 // pred_fallthru
      _
    // Predicated region
    $region62: #{tpu_custom_call.1} parent=1 // pred_check
      _
    $region63: #{tpu_custom_call.1} parent=1 // pred_check_branch
      %137 = sbr.rel (0) target = $region65
    $region64: #{tpu_custom_call.1} parent=1 // pred_region
      %138 = dma.done [#allocation12], 16
    $region65: #{tpu_custom_call.1} parent=1 // pred_fallthru
      _
    // Predicated region
    $region66: #{tpu_custom_call.1} parent=1 // pred_check
      _
    $region67: #{tpu_custom_call.1} parent=1 // pred_check_branch
      %140 = sbr.rel (0) target = $region69
    $region68: #{tpu_custom_call.1} parent=1 // pred_region
      %141 = dma.done [#allocation15], 384
    $region69: #{tpu_custom_call.1} parent=1 // pred_fallthru
      _
    // Predicated region
    $region70: #{tpu_custom_call.1} parent=1 // pred_check
      _
    $region71: #{tpu_custom_call.1} parent=1 // pred_check_branch
      %143 = sbr.rel (0) target = $region73
    $region72: #{tpu_custom_call.1} parent=1 // pred_region
      %144 = dma.done [#allocation15], 16
    $region73: #{tpu_custom_call.1} parent=1 // pred_fallthru
      _
    %v145 = vld [vmem:[#allocation2] sm:$0xff]
    %v146 = vld [vmem:[#allocation2 + $0x8] sm:$0xff]
    %v147 = vld [vmem:[#allocation2 + $0x10] sm:$0xff]
    %v148 = vld [vmem:[#allocation2 + $0x18] sm:$0xff]
    %v149 = vld [vmem:[#allocation2 + $0x20] sm:$0xff]
    %v150 = vld [vmem:[#allocation2 + $0x28] sm:$0xff]
    %v151 = vld [vmem:[#allocation2 + $0x30] sm:$0xff]
    %v152 = vld [vmem:[#allocation5] sm:$0xff]
    %v153 = vld [vmem:[#allocation5 + $0x8] sm:$0xff]
    %v154 = vld [vmem:[#allocation5 + $0x10] sm:$0xff]
    %v155 = vld [vmem:[#allocation5 + $0x18] sm:$0xff]
    %v156 = vld [vmem:[#allocation7] sm:$0x1]
    %v158 = vlaneseq
    %v159 = vshrl.u32 %v158, 7
    %v160 = vsub.s32 0, %v159
    %v161 = vrot.slane %v156, %v160
    %vm163 = vcmask 261120
    %v165 = vsel %vm163, %v145, 0
    %v168 = vsel %vm163, %v146, 0
    %v171 = vsel %vm163, %v147, 0
    %v174 = vsel %vm163, %v148, 0
    %v177 = vsel %vm163, %v149, 0
    %v180 = vsel %vm163, %v150, 0
    %v183 = vsel %vm163, %v151, 0
    %185 = vmatprep.subr.mxu0 0.0
    %186 = vmatpush1.msra.mxu0 %v152
    %187 = vmatprep.subr.mxu0 0.0
    %188 = vmatpush1.msra.mxu0 %v153
    %189 = vmatprep.subr.mxu0 0.0
    %190 = vmatpush1.msra.mxu0 %v154
    %191 = vmatprep.subr.mxu0 0.0
    %192 = vmatpush1.msra.mxu0 %v155
    %193 = vmatprep.subr.mxu0 0.0
    %194 = vmatpush1.msra.mxu0 0.0
    %195 = vmatprep.subr.mxu0 0.0
    %196 = vmatpush1.msra.mxu0 0.0
    %197 = vmatprep.subr.mxu0 0.0
    %198 = vmatpush1.msra.mxu0 0.0
    %199 = vmatprep.subr.mxu0 0.0
    %200 = vmatpush1.msra.mxu0 0.0
    %201 = vmatprep.subr.mxu0 0.0
    %202 = vmatpush1.msra.mxu0 0.0
    %203 = vmatprep.subr.mxu0 0.0
    %204 = vmatpush1.msra.mxu0 0.0
    %205 = vmatprep.subr.mxu0 0.0
    %206 = vmatpush1.msra.mxu0 0.0
    %207 = vmatprep.subr.mxu0 0.0
    %208 = vmatpush1.msra.mxu0 0.0
    %209 = vmatprep.subr.mxu0 0.0
    %210 = vmatpush1.msra.mxu0 0.0
    %211 = vmatprep.subr.mxu0 0.0
    %212 = vmatpush1.msra.mxu0 0.0
    %213 = vmatprep.subr.mxu0 0.0
    %214 = vmatpush1.msra.mxu0 0.0
    %215 = vmatprep.subr.mxu0 0.0
    %216 = vmatpush1.msra.mxu0 0.0
    %217 = vmatprep.subr.mxu0 0.0
    %218 = vmatpush1.msra.mxu0 0.0
    %219 = vmatprep.subr.mxu0 0.0
    %220 = vmatpush1.msra.mxu0 0.0
    %221 = vmatprep.subr.mxu0 0.0
    %222 = vmatpush1.msra.mxu0 0.0
    %223 = vmatprep.subr.mxu0 0.0
    %224 = vmatpush1.msra.mxu0 0.0
    %225 = vmatprep.subr.mxu0 0.0
    %226 = vmatpush1.msra.mxu0 0.0
    %227 = vmatprep.subr.mxu0 0.0
    %228 = vmatpush1.msra.mxu0 0.0
    %229 = vmatprep.subr.mxu0 0.0
    %230 = vmatpush1.msra.mxu0 0.0
    %231 = vmatprep.subr.mxu0 0.0
    %232 = vmatpush1.msra.mxu0 0.0
    %233 = vmatprep.subr.mxu0 0.0
    %234 = vmatpush1.msra.mxu0 0.0
    %235 = vmatprep.subr.mxu0 0.0
    %236 = vmatpush1.msra.mxu0 0.0
    %237 = vmatprep.subr.mxu0 0.0
    %238 = vmatpush1.msra.mxu0 0.0
    %239 = vmatprep.subr.mxu0 0.0
    %240 = vmatpush1.msra.mxu0 0.0
    %241 = vmatprep.subr.mxu0 0.0
    %242 = vmatpush1.msra.mxu0 0.0
    %243 = vmatprep.subr.mxu0 0.0
    %244 = vmatpush1.msra.mxu0 0.0
    %245 = vmatprep.subr.mxu0 0.0
    %246 = vmatpush1.msra.mxu0 0.0
    %247 = vmatprep.subr.mxu0 0.0
    %248 = vmatpush1.msra.mxu0 0.0
    %249 = vmatprep.mubr.f32.mxu0 0.0
    %250 = vmatmul.mubr.f32.gmra.mrb[0].mxu0 %v165
    %v251 = vpop.f32.mrb[0].mxu0
    %v252 = vadd.f32 %v161, %v251
    %v253 = vpop.f32.mrb[0].mxu0
    %254 = vmatprep.mubr.f32.mxu0 0.0
    %255 = vmatmul.mubr.f32.gmra.mrb[0].mxu0 %v168
    %v256 = vpop.f32.mrb[0].mxu0
    %v257 = vadd.f32 %v161, %v256
    %v258 = vpop.f32.mrb[0].mxu0
    %259 = vmatprep.mubr.f32.mxu0 0.0
    %260 = vmatmul.mubr.f32.gmra.mrb[0].mxu0 %v171
    %v261 = vpop.f32.mrb[0].mxu0
    %v262 = vadd.f32 %v161, %v261
    %v263 = vpop.f32.mrb[0].mxu0
    %264 = vmatprep.mubr.f32.mxu0 0.0
    %265 = vmatmul.mubr.f32.gmra.mrb[0].mxu0 %v174
    %v266 = vpop.f32.mrb[0].mxu0
    %v267 = vadd.f32 %v161, %v266
    %v268 = vpop.f32.mrb[0].mxu0
    %269 = vmatprep.mubr.f32.mxu0 0.0
    %270 = vmatmul.mubr.f32.gmra.mrb[0].mxu0 %v177
    %v271 = vpop.f32.mrb[0].mxu0
    %v272 = vadd.f32 %v161, %v271
    %v273 = vpop.f32.mrb[0].mxu0
    %274 = vmatprep.mubr.f32.mxu0 0.0
    %275 = vmatmul.mubr.f32.gmra.mrb[0].mxu0 %v180
    %v276 = vpop.f32.mrb[0].mxu0
    %v277 = vadd.f32 %v161, %v276
    %v278 = vpop.f32.mrb[0].mxu0
    %279 = vmatprep.mubr.f32.mxu0 0.0
    %280 = vmatmul.mubr.f32.gmra.mrb[0].mxu0 %v183
    %v281 = vpop.f32.mrb[0].mxu0
    %v282 = vadd.f32 %v161, %v281
    %v283 = vpop.f32.mrb[0].mxu0
    %284 = vdwg.mxu0
    %v285 = vxor.u32 %v252, 2147483648
    %v286 = vxor.u32 %v257, 2147483648
    %v287 = vxor.u32 %v262, 2147483648
    %v288 = vxor.u32 %v267, 2147483648
    %v289 = vxor.u32 %v272, 2147483648
    %v290 = vxor.u32 %v277, 2147483648
    %v291 = vxor.u32 %v282, 2147483648
    %v292 = vmul.f32 %v285, 1.442695
    %v293 = vpow.pop %v292
    %v294 = vmul.f32 %v286, 1.442695
    %v295 = vpow.pop %v294
    %v296 = vmul.f32 %v287, 1.442695
    %v297 = vpow.pop %v296
    %v298 = vmul.f32 %v288, 1.442695
    %v299 = vpow.pop %v298
    %v300 = vmul.f32 %v289, 1.442695
    %v301 = vpow.pop %v300
    %v302 = vmul.f32 %v290, 1.442695
    %v303 = vpow.pop %v302
    %v304 = vmul.f32 %v291, 1.442695
    %v305 = vpow.pop %v304
    %v306 = vadd.f32 %v293, 1.0
    %v307 = vadd.f32 %v295, 1.0
    %v308 = vadd.f32 %v297, 1.0
    %v309 = vadd.f32 %v299, 1.0
    %v310 = vadd.f32 %v301, 1.0
    %v311 = vadd.f32 %v303, 1.0
    %v312 = vadd.f32 %v305, 1.0
    %v313 = vrcp.pop %v306
    %v314 = vmul.f32 1.0, %v313
    %v315 = vrcp.pop %v307
    %v316 = vmul.f32 1.0, %v315
    %v317 = vrcp.pop %v308
    %v318 = vmul.f32 1.0, %v317
    %v319 = vrcp.pop %v309
    %v320 = vmul.f32 1.0, %v319
    %v321 = vrcp.pop %v310
    %v322 = vmul.f32 1.0, %v321
    %v323 = vrcp.pop %v311
    %v324 = vmul.f32 1.0, %v323
    %v325 = vrcp.pop %v312
    %v326 = vmul.f32 1.0, %v325
    %v327 = vld [vmem:[#allocation8] sm:$0xff]
    %v328 = vld [vmem:[#allocation8 + $0x8] sm:$0xff]
    %v329 = vld [vmem:[#allocation8 + $0x10] sm:$0xf]
    %v330 = vld [vmem:[#allocation10] sm:$0x1]
    %v332 = vlaneseq
    %v333 = vshrl.u32 %v332, 7
    %v334 = vsub.s32 0, %v333
    %v335 = vrot.slane %v330, %v334
    %vm337 = vcmask 162816
    %v339 = vsel %vm337, %v314, 0
    %v342 = vsel %vm337, %v316, 0
    %v345 = vsel %vm337, %v318, 0
    %v348 = vsel %vm337, %v320, 0
    %v351 = vsel %vm337, %v322, 0
    %v354 = vsel %vm337, %v324, 0
    %v357 = vsel %vm337, %v326, 0
    %vm359 = vcmask 1043456
    %v361 = vsel %vm359, %v329, 0
    %363 = vmatprep.subr.mxu0 0.0
    %364 = vmatpush1.msra.mxu0 %v327
    %365 = vmatprep.subr.mxu0 0.0
    %366 = vmatpush1.msra.mxu0 %v328
    %367 = vmatprep.subr.mxu0 0.0
    %368 = vmatpush1.msra.mxu0 %v361
    %369 = vmatprep.subr.mxu0 0.0
    %370 = vmatpush1.msra.mxu0 0.0
    %371 = vmatprep.subr.mxu0 0.0
    %372 = vmatpush1.msra.mxu0 0.0
    %373 = vmatprep.subr.mxu0 0.0
    %374 = vmatpush1.msra.mxu0 0.0
    %375 = vmatprep.subr.mxu0 0.0
    %376 = vmatpush1.msra.mxu0 0.0
    %377 = vmatprep.subr.mxu0 0.0
    %378 = vmatpush1.msra.mxu0 0.0
    %379 = vmatprep.subr.mxu0 0.0
    %380 = vmatpush1.msra.mxu0 0.0
    %381 = vmatprep.subr.mxu0 0.0
    %382 = vmatpush1.msra.mxu0 0.0
    %383 = vmatprep.subr.mxu0 0.0
    %384 = vmatpush1.msra.mxu0 0.0
    %385 = vmatprep.subr.mxu0 0.0
    %386 = vmatpush1.msra.mxu0 0.0
    %387 = vmatprep.subr.mxu0 0.0
    %388 = vmatpush1.msra.mxu0 0.0
    %389 = vmatprep.subr.mxu0 0.0
    %390 = vmatpush1.msra.mxu0 0.0
    %391 = vmatprep.subr.mxu0 0.0
    %392 = vmatpush1.msra.mxu0 0.0
    %393 = vmatprep.subr.mxu0 0.0
    %394 = vmatpush1.msra.mxu0 0.0
    %395 = vmatprep.subr.mxu0 0.0
    %396 = vmatpush1.msra.mxu0 0.0
    %397 = vmatprep.subr.mxu0 0.0
    %398 = vmatpush1.msra.mxu0 0.0
    %399 = vmatprep.subr.mxu0 0.0
    %400 = vmatpush1.msra.mxu0 0.0
    %401 = vmatprep.subr.mxu0 0.0
    %402 = vmatpush1.msra.mxu0 0.0
    %403 = vmatprep.subr.mxu0 0.0
    %404 = vmatpush1.msra.mxu0 0.0
    %405 = vmatprep.subr.mxu0 0.0
    %406 = vmatpush1.msra.mxu0 0.0
    %407 = vmatprep.subr.mxu0 0.0
    %408 = vmatpush1.msra.mxu0 0.0
    %409 = vmatprep.subr.mxu0 0.0
    %410 = vmatpush1.msra.mxu0 0.0
    %411 = vmatprep.subr.mxu0 0.0
    %412 = vmatpush1.msra.mxu0 0.0
    %413 = vmatprep.subr.mxu0 0.0
    %414 = vmatpush1.msra.mxu0 0.0
    %415 = vmatprep.subr.mxu0 0.0
    %416 = vmatpush1.msra.mxu0 0.0
    %417 = vmatprep.subr.mxu0 0.0
    %418 = vmatpush1.msra.mxu0 0.0
    %419 = vmatprep.subr.mxu0 0.0
    %420 = vmatpush1.msra.mxu0 0.0
    %421 = vmatprep.subr.mxu0 0.0
    %422 = vmatpush1.msra.mxu0 0.0
    %423 = vmatprep.subr.mxu0 0.0
    %424 = vmatpush1.msra.mxu0 0.0
    %425 = vmatprep.subr.mxu0 0.0
    %426 = vmatpush1.msra.mxu0 0.0
    %427 = vmatprep.mubr.f32.mxu0 0.0
    %428 = vmatmul.mubr.f32.gmra.mrb[0].mxu0 %v339
    %v429 = vpop.f32.mrb[0].mxu0
    %v430 = vadd.f32 %v335, %v429
    %v431 = vpop.f32.mrb[0].mxu0
    %432 = vmatprep.mubr.f32.mxu0 0.0
    %433 = vmatmul.mubr.f32.gmra.mrb[0].mxu0 %v342
    %v434 = vpop.f32.mrb[0].mxu0
    %v435 = vadd.f32 %v335, %v434
    %v436 = vpop.f32.mrb[0].mxu0
    %437 = vmatprep.mubr.f32.mxu0 0.0
    %438 = vmatmul.mubr.f32.gmra.mrb[0].mxu0 %v345
    %v439 = vpop.f32.mrb[0].mxu0
    %v440 = vadd.f32 %v335, %v439
    %v441 = vpop.f32.mrb[0].mxu0
    %442 = vmatprep.mubr.f32.mxu0 0.0
    %443 = vmatmul.mubr.f32.gmra.mrb[0].mxu0 %v348
    %v444 = vpop.f32.mrb[0].mxu0
    %v445 = vadd.f32 %v335, %v444
    %v446 = vpop.f32.mrb[0].mxu0
    %447 = vmatprep.mubr.f32.mxu0 0.0
    %448 = vmatmul.mubr.f32.gmra.mrb[0].mxu0 %v351
    %v449 = vpop.f32.mrb[0].mxu0
    %v450 = vadd.f32 %v335, %v449
    %v451 = vpop.f32.mrb[0].mxu0
    %452 = vmatprep.mubr.f32.mxu0 0.0
    %453 = vmatmul.mubr.f32.gmra.mrb[0].mxu0 %v354
    %v454 = vpop.f32.mrb[0].mxu0
    %v455 = vadd.f32 %v335, %v454
    %v456 = vpop.f32.mrb[0].mxu0
    %457 = vmatprep.mubr.f32.mxu0 0.0
    %458 = vmatmul.mubr.f32.gmra.mrb[0].mxu0 %v357
    %v459 = vpop.f32.mrb[0].mxu0
    %v460 = vadd.f32 %v335, %v459
    %v461 = vpop.f32.mrb[0].mxu0
    %462 = vdwg.mxu0
    %v463 = vxor.u32 %v430, 2147483648
    %v464 = vxor.u32 %v435, 2147483648
    %v465 = vxor.u32 %v440, 2147483648
    %v466 = vxor.u32 %v445, 2147483648
    %v467 = vxor.u32 %v450, 2147483648
    %v468 = vxor.u32 %v455, 2147483648
    %v469 = vxor.u32 %v460, 2147483648
    %v470 = vmul.f32 %v463, 1.442695
    %v471 = vpow.pop %v470
    %v472 = vmul.f32 %v464, 1.442695
    %v473 = vpow.pop %v472
    %v474 = vmul.f32 %v465, 1.442695
    %v475 = vpow.pop %v474
    %v476 = vmul.f32 %v466, 1.442695
    %v477 = vpow.pop %v476
    %v478 = vmul.f32 %v467, 1.442695
    %v479 = vpow.pop %v478
    %v480 = vmul.f32 %v468, 1.442695
    %v481 = vpow.pop %v480
    %v482 = vmul.f32 %v469, 1.442695
    %v483 = vpow.pop %v482
    %v484 = vadd.f32 %v471, 1.0
    %v485 = vadd.f32 %v473, 1.0
    %v486 = vadd.f32 %v475, 1.0
    %v487 = vadd.f32 %v477, 1.0
    %v488 = vadd.f32 %v479, 1.0
    %v489 = vadd.f32 %v481, 1.0
    %v490 = vadd.f32 %v483, 1.0
    %v491 = vrcp.pop %v484
    %v492 = vmul.f32 1.0, %v491
    %v493 = vrcp.pop %v485
    %v494 = vmul.f32 1.0, %v493
    %v495 = vrcp.pop %v486
    %v496 = vmul.f32 1.0, %v495
    %v497 = vrcp.pop %v487
    %v498 = vmul.f32 1.0, %v497
    %v499 = vrcp.pop %v488
    %v500 = vmul.f32 1.0, %v499
    %v501 = vrcp.pop %v489
    %v502 = vmul.f32 1.0, %v501
    %v503 = vrcp.pop %v490
    %v504 = vmul.f32 1.0, %v503
    %v505 = vld [vmem:[#allocation11] sm:$0xff]
    %v506 = vld [vmem:[#allocation13] sm:$0x1]
    %v508 = vlaneseq
    %v509 = vshrl.u32 %v508, 7
    %v510 = vsub.s32 0, %v509
    %v511 = vrot.slane %v506, %v510
    %vm513 = vcmask 64512
    %v515 = vsel %vm513, %v492, 0
    %v518 = vsel %vm513, %v494, 0
    %v521 = vsel %vm513, %v496, 0
    %v524 = vsel %vm513, %v498, 0
    %v527 = vsel %vm513, %v500, 0
    %v530 = vsel %vm513, %v502, 0
    %v533 = vsel %vm513, %v504, 0
    %535 = vmatprep.subr.mxu0 0.0
    %536 = vmatpush1.msra.mxu0 %v505
    %537 = vmatprep.subr.mxu0 0.0
    %538 = vmatpush1.msra.mxu0 0.0
    %539 = vmatprep.subr.mxu0 0.0
    %540 = vmatpush1.msra.mxu0 0.0
    %541 = vmatprep.subr.mxu0 0.0
    %542 = vmatpush1.msra.mxu0 0.0
    %543 = vmatprep.subr.mxu0 0.0
    %544 = vmatpush1.msra.mxu0 0.0
    %545 = vmatprep.subr.mxu0 0.0
    %546 = vmatpush1.msra.mxu0 0.0
    %547 = vmatprep.subr.mxu0 0.0
    %548 = vmatpush1.msra.mxu0 0.0
    %549 = vmatprep.subr.mxu0 0.0
    %550 = vmatpush1.msra.mxu0 0.0
    %551 = vmatprep.subr.mxu0 0.0
    %552 = vmatpush1.msra.mxu0 0.0
    %553 = vmatprep.subr.mxu0 0.0
    %554 = vmatpush1.msra.mxu0 0.0
    %555 = vmatprep.subr.mxu0 0.0
    %556 = vmatpush1.msra.mxu0 0.0
    %557 = vmatprep.subr.mxu0 0.0
    %558 = vmatpush1.msra.mxu0 0.0
    %559 = vmatprep.subr.mxu0 0.0
    %560 = vmatpush1.msra.mxu0 0.0
    %561 = vmatprep.subr.mxu0 0.0
    %562 = vmatpush1.msra.mxu0 0.0
    %563 = vmatprep.subr.mxu0 0.0
    %564 = vmatpush1.msra.mxu0 0.0
    %565 = vmatprep.subr.mxu0 0.0
    %566 = vmatpush1.msra.mxu0 0.0
    %567 = vmatprep.subr.mxu0 0.0
    %568 = vmatpush1.msra.mxu0 0.0
    %569 = vmatprep.subr.mxu0 0.0
    %570 = vmatpush1.msra.mxu0 0.0
    %571 = vmatprep.subr.mxu0 0.0
    %572 = vmatpush1.msra.mxu0 0.0
    %573 = vmatprep.subr.mxu0 0.0
    %574 = vmatpush1.msra.mxu0 0.0
    %575 = vmatprep.subr.mxu0 0.0
    %576 = vmatpush1.msra.mxu0 0.0
    %577 = vmatprep.subr.mxu0 0.0
    %578 = vmatpush1.msra.mxu0 0.0
    %579 = vmatprep.subr.mxu0 0.0
    %580 = vmatpush1.msra.mxu0 0.0
    %581 = vmatprep.subr.mxu0 0.0
    %582 = vmatpush1.msra.mxu0 0.0
    %583 = vmatprep.subr.mxu0 0.0
    %584 = vmatpush1.msra.mxu0 0.0
    %585 = vmatprep.subr.mxu0 0.0
    %586 = vmatpush1.msra.mxu0 0.0
    %587 = vmatprep.subr.mxu0 0.0
    %588 = vmatpush1.msra.mxu0 0.0
    %589 = vmatprep.subr.mxu0 0.0
    %590 = vmatpush1.msra.mxu0 0.0
    %591 = vmatprep.subr.mxu0 0.0
    %592 = vmatpush1.msra.mxu0 0.0
    %593 = vmatprep.subr.mxu0 0.0
    %594 = vmatpush1.msra.mxu0 0.0
    %595 = vmatprep.subr.mxu0 0.0
    %596 = vmatpush1.msra.mxu0 0.0
    %597 = vmatprep.subr.mxu0 0.0
    %598 = vmatpush1.msra.mxu0 0.0
    %599 = vmatprep.mubr.f32.mxu0 0.0
    %600 = vmatmul.mubr.f32.gmra.mrb[0].mxu0 %v515
    %v601 = vpop.f32.mrb[0].mxu0
    %v602 = vadd.f32 %v511, %v601
    %v603 = vpop.f32.mrb[0].mxu0
    %604 = vmatprep.mubr.f32.mxu0 0.0
    %605 = vmatmul.mubr.f32.gmra.mrb[0].mxu0 %v518
    %v606 = vpop.f32.mrb[0].mxu0
    %v607 = vadd.f32 %v511, %v606
    %v608 = vpop.f32.mrb[0].mxu0
    %609 = vmatprep.mubr.f32.mxu0 0.0
    %610 = vmatmul.mubr.f32.gmra.mrb[0].mxu0 %v521
    %v611 = vpop.f32.mrb[0].mxu0
    %v612 = vadd.f32 %v511, %v611
    %v613 = vpop.f32.mrb[0].mxu0
    %614 = vmatprep.mubr.f32.mxu0 0.0
    %615 = vmatmul.mubr.f32.gmra.mrb[0].mxu0 %v524
    %v616 = vpop.f32.mrb[0].mxu0
    %v617 = vadd.f32 %v511, %v616
    %v618 = vpop.f32.mrb[0].mxu0
    %619 = vmatprep.mubr.f32.mxu0 0.0
    %620 = vmatmul.mubr.f32.gmra.mrb[0].mxu0 %v527
    %v621 = vpop.f32.mrb[0].mxu0
    %v622 = vadd.f32 %v511, %v621
    %v623 = vpop.f32.mrb[0].mxu0
    %624 = vmatprep.mubr.f32.mxu0 0.0
    %625 = vmatmul.mubr.f32.gmra.mrb[0].mxu0 %v530
    %v626 = vpop.f32.mrb[0].mxu0
    %v627 = vadd.f32 %v511, %v626
    %v628 = vpop.f32.mrb[0].mxu0
    %629 = vmatprep.mubr.f32.mxu0 0.0
    %630 = vmatmul.mubr.f32.gmra.mrb[0].mxu0 %v533
    %v631 = vpop.f32.mrb[0].mxu0
    %v632 = vadd.f32 %v511, %v631
    %v633 = vpop.f32.mrb[0].mxu0
    %634 = vdwg.mxu0
    %v635 = vxor.u32 %v602, 2147483648
    %v636 = vxor.u32 %v607, 2147483648
    %v637 = vxor.u32 %v612, 2147483648
    %v638 = vxor.u32 %v617, 2147483648
    %v639 = vxor.u32 %v622, 2147483648
    %v640 = vxor.u32 %v627, 2147483648
    %v641 = vxor.u32 %v632, 2147483648
    %v642 = vmul.f32 %v635, 1.442695
    %v643 = vpow.pop %v642
    %v644 = vmul.f32 %v636, 1.442695
    %v645 = vpow.pop %v644
    %v646 = vmul.f32 %v637, 1.442695
    %v647 = vpow.pop %v646
    %v648 = vmul.f32 %v638, 1.442695
    %v649 = vpow.pop %v648
    %v650 = vmul.f32 %v639, 1.442695
    %v651 = vpow.pop %v650
    %v652 = vmul.f32 %v640, 1.442695
    %v653 = vpow.pop %v652
    %v654 = vmul.f32 %v641, 1.442695
    %v655 = vpow.pop %v654
    %v656 = vadd.f32 %v643, 1.0
    %v657 = vadd.f32 %v645, 1.0
    %v658 = vadd.f32 %v647, 1.0
    %v659 = vadd.f32 %v649, 1.0
    %v660 = vadd.f32 %v651, 1.0
    %v661 = vadd.f32 %v653, 1.0
    %v662 = vadd.f32 %v655, 1.0
    %v663 = vrcp.pop %v656
    %v664 = vmul.f32 1.0, %v663
    %v665 = vrcp.pop %v657
    %v666 = vmul.f32 1.0, %v665
    %v667 = vrcp.pop %v658
    %v668 = vmul.f32 1.0, %v667
    %v669 = vrcp.pop %v659
    %v670 = vmul.f32 1.0, %v669
    %v671 = vrcp.pop %v660
    %v672 = vmul.f32 1.0, %v671
    %v673 = vrcp.pop %v661
    %v674 = vmul.f32 1.0, %v673
    %v675 = vrcp.pop %v662
    %v676 = vmul.f32 1.0, %v675
    %v677 = vld [vmem:[#allocation14] sm:$0xff]
    %v678 = vld [vmem:[#allocation14 + $0x8] sm:$0xff]
    %v679 = vld [vmem:[#allocation14 + $0x10] sm:$0xf]
    %v680 = vld [vmem:[#allocation16] sm:$0x1]
    %v682 = vlaneseq
    %v683 = vshrl.u32 %v682, 7
    %v684 = vsub.s32 0, %v683
    %v685 = vrot.slane %v680, %v684
    %v688 = vsel %vm337, %v664, 0
    %v691 = vsel %vm337, %v666, 0
    %v694 = vsel %vm337, %v668, 0
    %v697 = vsel %vm337, %v670, 0
    %v700 = vsel %vm337, %v672, 0
    %v703 = vsel %vm337, %v674, 0
    %v706 = vsel %vm337, %v676, 0
    %v709 = vsel %vm359, %v679, 0
    %711 = vmatprep.subr.mxu0 0.0
    %712 = vmatpush1.msra.mxu0 %v677
    %713 = vmatprep.subr.mxu0 0.0
    %714 = vmatpush1.msra.mxu0 %v678
    %715 = vmatprep.subr.mxu0 0.0
    %716 = vmatpush1.msra.mxu0 %v709
    %717 = vmatprep.subr.mxu0 0.0
    %718 = vmatpush1.msra.mxu0 0.0
    %719 = vmatprep.subr.mxu0 0.0
    %720 = vmatpush1.msra.mxu0 0.0
    %721 = vmatprep.subr.mxu0 0.0
    %722 = vmatpush1.msra.mxu0 0.0
    %723 = vmatprep.subr.mxu0 0.0
    %724 = vmatpush1.msra.mxu0 0.0
    %725 = vmatprep.subr.mxu0 0.0
    %726 = vmatpush1.msra.mxu0 0.0
    %727 = vmatprep.subr.mxu0 0.0
    %728 = vmatpush1.msra.mxu0 0.0
    %729 = vmatprep.subr.mxu0 0.0
    %730 = vmatpush1.msra.mxu0 0.0
    %731 = vmatprep.subr.mxu0 0.0
    %732 = vmatpush1.msra.mxu0 0.0
    %733 = vmatprep.subr.mxu0 0.0
    %734 = vmatpush1.msra.mxu0 0.0
    %735 = vmatprep.subr.mxu0 0.0
    %736 = vmatpush1.msra.mxu0 0.0
    %737 = vmatprep.subr.mxu0 0.0
    %738 = vmatpush1.msra.mxu0 0.0
    %739 = vmatprep.subr.mxu0 0.0
    %740 = vmatpush1.msra.mxu0 0.0
    %741 = vmatprep.subr.mxu0 0.0
    %742 = vmatpush1.msra.mxu0 0.0
    %743 = vmatprep.subr.mxu0 0.0
    %744 = vmatpush1.msra.mxu0 0.0
    %745 = vmatprep.subr.mxu0 0.0
    %746 = vmatpush1.msra.mxu0 0.0
    %747 = vmatprep.subr.mxu0 0.0
    %748 = vmatpush1.msra.mxu0 0.0
    %749 = vmatprep.subr.mxu0 0.0
    %750 = vmatpush1.msra.mxu0 0.0
    %751 = vmatprep.subr.mxu0 0.0
    %752 = vmatpush1.msra.mxu0 0.0
    %753 = vmatprep.subr.mxu0 0.0
    %754 = vmatpush1.msra.mxu0 0.0
    %755 = vmatprep.subr.mxu0 0.0
    %756 = vmatpush1.msra.mxu0 0.0
    %757 = vmatprep.subr.mxu0 0.0
    %758 = vmatpush1.msra.mxu0 0.0
    %759 = vmatprep.subr.mxu0 0.0
    %760 = vmatpush1.msra.mxu0 0.0
    %761 = vmatprep.subr.mxu0 0.0
    %762 = vmatpush1.msra.mxu0 0.0
    %763 = vmatprep.subr.mxu0 0.0
    %764 = vmatpush1.msra.mxu0 0.0
    %765 = vmatprep.subr.mxu0 0.0
    %766 = vmatpush1.msra.mxu0 0.0
    %767 = vmatprep.subr.mxu0 0.0
    %768 = vmatpush1.msra.mxu0 0.0
    %769 = vmatprep.subr.mxu0 0.0
    %770 = vmatpush1.msra.mxu0 0.0
    %771 = vmatprep.subr.mxu0 0.0
    %772 = vmatpush1.msra.mxu0 0.0
    %773 = vmatprep.subr.mxu0 0.0
    %774 = vmatpush1.msra.mxu0 0.0
    %775 = vmatprep.mubr.f32.mxu0 0.0
    %776 = vmatmul.mubr.f32.gmra.mrb[0].mxu0 %v688
    %v777 = vpop.f32.mrb[0].mxu0
    %v778 = vadd.f32 %v685, %v777
    %v779 = vpop.f32.mrb[0].mxu0
    %780 = vmatprep.mubr.f32.mxu0 0.0
    %781 = vmatmul.mubr.f32.gmra.mrb[0].mxu0 %v691
    %v782 = vpop.f32.mrb[0].mxu0
    %v783 = vadd.f32 %v685, %v782
    %v784 = vpop.f32.mrb[0].mxu0
    %785 = vmatprep.mubr.f32.mxu0 0.0
    %786 = vmatmul.mubr.f32.gmra.mrb[0].mxu0 %v694
    %v787 = vpop.f32.mrb[0].mxu0
    %v788 = vadd.f32 %v685, %v787
    %v789 = vpop.f32.mrb[0].mxu0
    %790 = vmatprep.mubr.f32.mxu0 0.0
    %791 = vmatmul.mubr.f32.gmra.mrb[0].mxu0 %v697
    %v792 = vpop.f32.mrb[0].mxu0
    %v793 = vadd.f32 %v685, %v792
    %v794 = vpop.f32.mrb[0].mxu0
    %795 = vmatprep.mubr.f32.mxu0 0.0
    %796 = vmatmul.mubr.f32.gmra.mrb[0].mxu0 %v700
    %v797 = vpop.f32.mrb[0].mxu0
    %v798 = vadd.f32 %v685, %v797
    %v799 = vpop.f32.mrb[0].mxu0
    %800 = vmatprep.mubr.f32.mxu0 0.0
    %801 = vmatmul.mubr.f32.gmra.mrb[0].mxu0 %v703
    %v802 = vpop.f32.mrb[0].mxu0
    %v803 = vadd.f32 %v685, %v802
    %v804 = vpop.f32.mrb[0].mxu0
    %805 = vmatprep.mubr.f32.mxu0 0.0
    %806 = vmatmul.mubr.f32.gmra.mrb[0].mxu0 %v706
    %v807 = vpop.f32.mrb[0].mxu0
    %v808 = vadd.f32 %v685, %v807
    %v809 = vpop.f32.mrb[0].mxu0
    %810 = vdwg.mxu0
    %811 = vst.msk [vmem:[#allocation17] sm:$0xff] %vm163, %v778
    %812 = vst.msk [vmem:[#allocation17 + $0x8] sm:$0xff] %vm163, %v783
    %813 = vst.msk [vmem:[#allocation17 + $0x10] sm:$0xff] %vm163, %v788
    %814 = vst.msk [vmem:[#allocation17 + $0x18] sm:$0xff] %vm163, %v793
    %815 = vst.msk [vmem:[#allocation17 + $0x20] sm:$0xff] %vm163, %v798
    %816 = vst.msk [vmem:[#allocation17 + $0x28] sm:$0xff] %vm163, %v803
    %817 = vst.msk [vmem:[#allocation17 + $0x30] sm:$0xff] %vm163, %v808
    // Predicated region
    $region74: #{tpu_custom_call.1} parent=1 // pred_check
      _
    $region75: #{tpu_custom_call.1} parent=1 // pred_check_branch
      %819 = sbr.rel (0) target = $region77
    $region76: #{tpu_custom_call.1} parent=1 // pred_region
      %s821 = ssub.s32 896, 896
      %822 = vsyncadd [#allocation4], %s821
      %s823 = sshll.u32 [#allocation17], 4
      %s824 = int_to_ptr.vmem [resolvable:$true] %s823
      %829 = dma.vmem_to_hbm [thread:$0]  %s824, 896, %s9, [#allocation4], 128, 128, 8
    $region77: #{tpu_custom_call.1} parent=1 // pred_fallthru
      _
    // Predicated region
    $region78: #{tpu_custom_call.1} parent=1 // pred_check
      _
    $region79: #{tpu_custom_call.1} parent=1 // pred_check_branch
      %831 = sbr.rel (0) target = $region81
    $region80: #{tpu_custom_call.1} parent=1 // pred_region
      %832 = dma.done [#allocation4], 896
    $region81: #{tpu_custom_call.1} parent=1 // pred_fallthru
      _
    %833 = vsyncpa [#allocation3], 1
    %834 = vsyncpa [#allocation6], 1
    %835 = vsyncpa [#allocation9], 1
    %836 = vsyncpa [#allocation12], 1
    %837 = vsyncpa [#allocation15], 1
    %838 = vsyncpa [#allocation4], 1

</llo_original>
